<compile_context>
chip_gen: v7x
topology: tpu7x:2x2x1
jax: 0.10.0
libtpu: 0.0.40
codegen_flags: <defaults>
</compile_context>

<pallas_src>
import math
import functools

import jax
import jax.numpy as jnp
from jax.experimental import pallas as pl
from jax.experimental.pallas import tpu as pltpu


def make_pos_embed(max_length: int, embed_size: int) -> jnp.ndarray:
    """Sinusoidal positional embedding, identical to the PyTorch helper."""
    t = jnp.arange(1, max_length + 1, dtype=jnp.float32)                      # (T,)
    omega = jnp.arange(1, embed_size // 2 + 1, dtype=jnp.float32) / embed_size
    wt = t[:, None] * jnp.power(10000.0, -omega)[None, :]                     # (T, E/2)
    pos = jnp.zeros((max_length, embed_size), dtype=jnp.float32)
    pos = pos.at[:, 0::2].set(jnp.sin(wt))
    pos = pos.at[:, 1::2].set(jnp.cos(wt))
    return pos                                                                # (max_length, E)


# ----------------------- primary path: VMEM-resident table -------------------

def _embed_resident_kernel(ids_ref, table_ref, pos_ref, out_ref, *, scale):
    """One grid step = one (tm, E) output tile.

    ids_ref   : (tm, 1) int32  VMEM   token ids for this tile (sublane axis)
    table_ref : (V, E)  f32    VMEM   resident embedding table (constant index)
    pos_ref   : (tm, E) f32    VMEM   resident positional slab (constant index)
    out_ref   : (tm, E) f32    VMEM   (E % 128 == 0 -> lane-dense stores)
    """
    tm = ids_ref.shape[0]
    v = table_ref.shape[0]
    # One-hot lookup on the MXU: (tm, V) @ (V, E) -> (tm, E), f32 accumulate.
    # Out-of-range / negative ids match no column and yield a zero row
    # (PyTorch would raise; see correctness notes).
    lane_ids = jax.lax.broadcasted_iota(jnp.int32, (tm, v), 1)
    one_hot = (ids_ref[...] == lane_ids).astype(table_ref.dtype)
    rows = jnp.dot(one_hot, table_ref[...], preferred_element_type=jnp.float32)
    # scale + positional add on the VPU (huge slack; effectively free).
    out_ref[...] = rows * scale + pos_ref[...]


# ----------------------- fallback path: HBM row gather -----------------------

_GATHER_SEM_RING = 8   # small semaphore ring instead of one semaphore per token


def _embed_gather_kernel(ids_ref, table_ref, pos_ref, out_ref, sems, *,
                         tm, vocab_size, scale):
    """Fallback when the table is too large to keep VMEM-resident.

    ids_ref   : (T,)    int32 SMEM   scalar-prefetched flattened token ids
    table_ref : (V, E)  f32   HBM    (memory_space=pl.ANY) gathered row-wise
    pos_ref   : (tm, E) f32   VMEM   resident positional slab
    out_ref   : (tm, E) f32   VMEM   rows are DMA'd straight into it (no staging)
    sems      : (_GATHER_SEM_RING,) DMA semaphore ring
    """
    t0 = pl.program_id(0) * tm
    in_flight = [None] * _GATHER_SEM_RING
    # tm is small & static -> unrolls at trace time; up to _GATHER_SEM_RING row
    # DMAs are kept in flight at any time.
    for i in range(tm):
        slot = i % _GATHER_SEM_RING
        if in_flight[slot] is not None:
            in_flight[slot].wait()
        idx = ids_ref[t0 + i]                              # scalar read from SMEM
        # Clamp out-of-range ids instead of fetching an arbitrary HBM row.
        idx = jnp.minimum(jnp.maximum(idx, 0), vocab_size - 1)
        cp = pltpu.make_async_copy(table_ref.at[pl.ds(idx, 1)],   # (1, E) HBM row
                                   out_ref.at[pl.ds(i, 1)],       # (1, E) VMEM row
                                   sems.at[slot])
        cp.start()
        in_flight[slot] = cp
    for cp in in_flight:
        if cp is not None:
            cp.wait()
    # In-place scale + positional add (no staging scratch, saves tm*E*4 VMEM).
    out_ref[...] = out_ref[...] * scale + pos_ref[...]


# ------------------------------- wrapper --------------------------------------

def _vmem_capacity_bytes(default_bytes: int = 64 << 20) -> int:
    """Per-generation VMEM capacity (v7x: 64 MiB, v5e/v6e: 128 MiB)."""
    try:
        info = pltpu.get_tpu_info()
        cap = getattr(info, "vmem_capacity_bytes", None)
        if cap:
            return int(cap)
    except Exception:
        pass
    return default_bytes


def _choose_batch_tile(B: int, L: int, max_tile_rows: int) -> int:
    """Largest divisor d of B with d*L sublane-aligned and <= max_tile_rows.

    No forced >=2-grid-step split: fewer, larger steps amortize the ~0.35 us
    per-step pipeline overhead (single-TC v5e/v6e) and keep stores dense.
    """
    aligned = [d for d in range(1, B + 1) if B % d == 0 and (d * L) % 8 == 0]
    within = [d for d in aligned if d * L <= max_tile_rows]
    if within:
        return max(within)
    if aligned:
        return min(aligned)     # even one batch row exceeds the cap; smallest aligned
    return B                    # full-array tile: always layout-legal


def embedding_forward(ids, embed_table, pos_embed, *, max_tile_rows=512,
                      force_gather=False):
    """ids: (B, L) int32; embed_table: (V, E) f32; pos_embed: (max_length, E) f32."""
    B, L = ids.shape
    V, E = embed_table.shape
    T = B * L
    scale = float(math.sqrt(E))        # Python float -> trace literal (fixes the
                                       # "kernel captures constants [f32[]]" error)

    b_tile = _choose_batch_tile(B, L, max_tile_rows)
    tm = b_tile * L
    n_tiles = T // tm

    # Positional slab: identical for every tile -> constant-index resident block.
    pos_tile = jnp.tile(pos_embed[:L].astype(jnp.float32), (b_tile, 1))       # (tm, E)

    # Per-generation VMEM budget: resident path only when the (double-buffered)
    # table plus tiles leave ample headroom.
    vmem_cap = _vmem_capacity_bytes()
    vmem_limit = min(int(0.85 * vmem_cap), vmem_cap - (4 << 20))
    table_bytes = V * E * embed_table.dtype.itemsize
    tile_bytes = tm * E * 4
    resident_need = 2 * table_bytes + 6 * tile_bytes + 2 * tm * max(V, 128) * 4
    use_resident = (not force_gather) and (resident_need <= int(0.8 * vmem_limit))

    compiler_params = pltpu.CompilerParams(
        dimension_semantics=("parallel",),
        vmem_limit_bytes=vmem_limit)

    if use_resident:
        ids_col = ids.reshape(T, 1).astype(jnp.int32)
        kernel = functools.partial(_embed_resident_kernel, scale=scale)
        out_flat = pl.pallas_call(
            kernel,
            out_shape=jax.ShapeDtypeStruct((T, E), jnp.float32),
            grid_spec=pltpu.PrefetchScalarGridSpec(
                num_scalar_prefetch=0,
                grid=(n_tiles,),
                in_specs=[
                    pl.BlockSpec((tm, 1), lambda t: (t, 0)),     # ids tile (sublanes)
                    pl.BlockSpec((V, E), lambda t: (0, 0)),      # resident table
                    pl.BlockSpec((tm, E), lambda t: (0, 0)),     # resident pos slab
                ],
                out_specs=pl.BlockSpec((tm, E), lambda t: (t, 0)),
            ),
            compiler_params=compiler_params,
        )(ids_col, embed_table.astype(jnp.float32), pos_tile)
    else:
        # Large-vocab fallback: table stays in HBM, per-row DMA gather.
        ids_flat = ids.reshape(T).astype(jnp.int32)
        kernel = functools.partial(_embed_gather_kernel, tm=tm, vocab_size=V,
                                   scale=scale)
        out_flat = pl.pallas_call(
            kernel,
            out_shape=jax.ShapeDtypeStruct((T, E), jnp.float32),
            grid_spec=pltpu.PrefetchScalarGridSpec(
                num_scalar_prefetch=1,                            # ids -> SMEM
                grid=(n_tiles,),
                in_specs=[
                    pl.BlockSpec(memory_space=pl.ANY),            # table in HBM
                    pl.BlockSpec((tm, E), lambda t, ids: (0, 0)), # resident pos slab
                ],
                out_specs=pl.BlockSpec((tm, E), lambda t, ids: (t, 0)),
                scratch_shapes=[
                    pltpu.SemaphoreType.DMA((_GATHER_SEM_RING,)),
                ],
            ),
            compiler_params=compiler_params,
        )(ids_flat, embed_table.astype(jnp.float32), pos_tile)

    return out_flat.reshape(B, L, E)


if __name__ == "__main__":
    # Small shapes consistent with the module.
    max_length = 16
    vocab_size = 32
    pad_idx = 0
    embed_size = 256
    B, L = 2, 8

    key = jax.random.PRNGKey(0)
    k_table, k_ids = jax.random.split(key)

    # nn.Embedding init ~ N(0, 1); padding_idx row zeroed at init.
    embed_table = jax.random.normal(k_table, (vocab_size, embed_size),
                                    dtype=jnp.float32)
    embed_table = embed_table.at[pad_idx].set(0.0)

    pos_embed = make_pos_embed(max_length, embed_size)
    ids = jax.random.randint(k_ids, (B, L), 0, vocab_size, dtype=jnp.int32)

    out = embedding_forward(ids, embed_table, pos_embed)
    jax.block_until_ready(out)

    # Correctness check against a plain-JAX reference.
    ref = embed_table[ids] * math.sqrt(embed_size) + pos_embed[None, :L]
    assert out.shape == (B, L, embed_size)
    assert jnp.allclose(out, ref, atol=1e-5, rtol=1e-5)

    print("KERNEL_OK")
</pallas_src>

<mosaic_0001>
module attributes {stable_mosaic.version = 11 : i64} {
  func.func @_embed_resident_kernel(%arg0: i32, %arg1: memref<16x1xi32, #tpu.memory_space<vmem>>, %arg2: memref<32x256xf32, #tpu.memory_space<vmem>>, %arg3: memref<16x256xf32, #tpu.memory_space<vmem>>, %arg4: memref<16x256xf32, #tpu.memory_space<vmem>>) attributes {dimension_semantics = [#tpu.dimension_semantics<parallel>], iteration_bounds = array<i64: 1>, scalar_prefetch = 0 : i64, scratch_operands = 0 : i64, tpu.core_type = #tpu.core_type<tc>, window_params = [{transform_indices = @transform_0, window_bounds = array<i64: 16, 1>}, {pipeline_mode = #tpu.pipeline_mode<synchronous>, transform_indices = @transform_1, window_bounds = array<i64: 32, 256>}, {pipeline_mode = #tpu.pipeline_mode<synchronous>, transform_indices = @transform_2, window_bounds = array<i64: 16, 256>}, {transform_indices = @transform_3, window_bounds = array<i64: 16, 256>}]} {
    %0 = tpu.iota {dimensions = array<i32: 1>} : vector<16x32xi32>
    %c0 = arith.constant 0 : index
    %c0_0 = arith.constant 0 : index
    %1 = vector.load %arg1[%c0, %c0_0] : memref<16x1xi32, #tpu.memory_space<vmem>>, vector<16x1xi32>
    %2 = vector.broadcast %1 : vector<16x1xi32> to vector<16x32xi32>
    %3 = arith.cmpi eq, %2, %0 : vector<16x32xi32>
    %4 = arith.extui %3 : vector<16x32xi1> to vector<16x32xi32>
    %5 = arith.sitofp %4 : vector<16x32xi32> to vector<16x32xf32>
    %c0_1 = arith.constant 0 : index
    %c0_2 = arith.constant 0 : index
    %6 = vector.load %arg2[%c0_1, %c0_2] : memref<32x256xf32, #tpu.memory_space<vmem>>, vector<32x256xf32>
    %cst = arith.constant dense<0.000000e+00> : vector<16x256xf32>
    %7 = tpu.matmul %5, %6, %cst {dimension_numbers = #tpu.dot_dimension_numbers<[1], [0], [0], [1], [0, 0, 1, 1], [], []>} : vector<16x32xf32>, vector<32x256xf32>, vector<16x256xf32> -> vector<16x256xf32>
    %cst_3 = arith.constant 1.600000e+01 : f32
    %8 = vector.broadcast %cst_3 : f32 to vector<16x256xf32>
    %9 = arith.mulf %7, %8 : vector<16x256xf32>
    %c0_4 = arith.constant 0 : index
    %c0_5 = arith.constant 0 : index
    %10 = vector.load %arg3[%c0_4, %c0_5] : memref<16x256xf32, #tpu.memory_space<vmem>>, vector<16x256xf32>
    %11 = arith.addf %9, %10 : vector<16x256xf32>
    %c0_6 = arith.constant 0 : index
    %c0_7 = arith.constant 0 : index
    %12 = vector.load %arg4[%c0_6, %c0_7] : memref<16x256xf32, #tpu.memory_space<vmem>>, vector<16x256xf32>
    tpu.vector_store %arg4[%c0_6, %c0_7], %11 {strides = array<i32>} : memref<16x256xf32, #tpu.memory_space<vmem>>, vector<16x256xf32>,
    return
  }
  func.func @transform_0(%arg0: i32) -> (i32, i32) {
    %c0_i32 = arith.constant 0 : i32
    %c0_i32_0 = arith.constant 0 : i32
    return %arg0, %c0_i32 : i32, i32
  }
  func.func @transform_1(%arg0: i32) -> (i32, i32) {
    %c0_i32 = arith.constant 0 : i32
    %c0_i32_0 = arith.constant 0 : i32
    %c0_i32_1 = arith.constant 0 : i32
    return %c0_i32, %c0_i32_0 : i32, i32
  }
  func.func @transform_2(%arg0: i32) -> (i32, i32) {
    %c0_i32 = arith.constant 0 : i32
    %c0_i32_0 = arith.constant 0 : i32
    %c0_i32_1 = arith.constant 0 : i32
    return %c0_i32, %c0_i32_0 : i32, i32
  }
  func.func @transform_3(%arg0: i32) -> (i32, i32) {
    %c0_i32 = arith.constant 0 : i32
    %c0_i32_0 = arith.constant 0 : i32
    return %arg0, %c0_i32 : i32, i32
  }
}

</mosaic_0001>

<llo_original>
// kernel: tpu_custom_call.1
$region0: #{tpu_custom_call.1}
  #allocation0 [shape = 'u32[]', space=smem, size = 0x4, offset = 0x4, fixed_abs, tag = 'smem constant byte address 0x4 - core index']
  #allocation1 [shape = 'u32[144,128]{1,0:T(1,128)}', space=vmem, size = 0x12000, scoped, tag = 'internal scratch']
  %s0 = inlined_call_operand.vmem [shape: s32[16,1], index: 0, kind: input, shape index: {}]
  %s1 = inlined_call_operand.hbm [shape: f32[32,256], index: 1, kind: input, shape index: {}]
  %s2 = inlined_call_operand.hbm [shape: f32[16,256], index: 2, kind: input, shape index: {}]
  %s3 = inlined_call_operand.hbm [shape: f32[16,256], index: 3, kind: output, shape index: {}]
  %s4 = sld [smem:[#allocation0]]
  $region30: #{tpu_custom_call.1} parent=0
    _
  %s6 = ssub.s32 1, %s4
  %s7 = scalar_select 0, %s6, %s4
  $region1: #{tpu_custom_call.1} parent=0
    #allocation2 [shape = 'u8[32768]{0}', space=vmem, size = 0x8000, scoped, tag = 'input window, operand 1, single buffered']
    #allocation3 [shape = 's32[1]{0}', space=sflag, size = 0x4, scoped, tag = 'scoped memory for tpu_custom_call.1']
    #allocation4 [shape = 's32[1]{0}', space=sflag, size = 0x4, scoped, tag = 'scoped memory for tpu_custom_call.1']
    #allocation5 [shape = 'u8[16384]{0}', space=vmem, size = 0x4000, scoped, tag = 'input window, operand 2, single buffered']
    #allocation6 [shape = 's32[1]{0}', space=sflag, size = 0x4, scoped, tag = 'scoped memory for tpu_custom_call.1']
    #allocation7 [shape = 'u8[16384]{0}', space=vmem, size = 0x4000, scoped, tag = 'output window, operand 0, single buffered']
    %8 = vsyncpa [#allocation3], 0
    %9 = vsyncpa [#allocation6], 0
    %10 = vsyncpa [#allocation4], 0
    // Predicated region
    $region2: #{tpu_custom_call.1} parent=1 // pred_check
      _
    $region3: #{tpu_custom_call.1} parent=1 // pred_check_branch
      %12 = sbr.rel (0) target = $region5
    $region4: #{tpu_custom_call.1} parent=1 // pred_region
      _
    $region5: #{tpu_custom_call.1} parent=1 // pred_fallthru
      _
    // Predicated region
    $region6: #{tpu_custom_call.1} parent=1 // pred_check
      _
    $region7: #{tpu_custom_call.1} parent=1 // pred_check_branch
      %14 = sbr.rel (0) target = $region9
    $region8: #{tpu_custom_call.1} parent=1 // pred_region
      %s16 = ssub.s32 1024, 1024
      %17 = vsyncadd [#allocation3], %s16
      %s18 = sshll.u32 [#allocation2], 4
      %s19 = int_to_ptr.vmem [resolvable:$true] %s18
      %24 = dma.hbm_to_vmem [thread:$0]  %s1, 1024, %s19, [#allocation3], 256, 256, 16
    $region9: #{tpu_custom_call.1} parent=1 // pred_fallthru
      _
    // Predicated region
    $region10: #{tpu_custom_call.1} parent=1 // pred_check
      _
    $region11: #{tpu_custom_call.1} parent=1 // pred_check_branch
      %26 = sbr.rel (0) target = $region13
    $region12: #{tpu_custom_call.1} parent=1 // pred_region
      %s28 = ssub.s32 512, 512
      %29 = vsyncadd [#allocation6], %s28
      %s30 = sshll.u32 [#allocation5], 4
      %s31 = int_to_ptr.vmem [resolvable:$true] %s30
      %36 = dma.hbm_to_vmem [thread:$0]  %s2, 512, %s31, [#allocation6], 256, 256, 16
    $region13: #{tpu_custom_call.1} parent=1 // pred_fallthru
      _
    // Predicated region
    $region14: #{tpu_custom_call.1} parent=1 // pred_check
      _
    $region15: #{tpu_custom_call.1} parent=1 // pred_check_branch
      %38 = sbr.rel (0) target = $region17
    $region16: #{tpu_custom_call.1} parent=1 // pred_region
      %39 = dma.done [#allocation3], 1024
    $region17: #{tpu_custom_call.1} parent=1 // pred_fallthru
      _
    // Predicated region
    $region18: #{tpu_custom_call.1} parent=1 // pred_check
      _
    $region19: #{tpu_custom_call.1} parent=1 // pred_check_branch
      %41 = sbr.rel (0) target = $region21
    $region20: #{tpu_custom_call.1} parent=1 // pred_region
      %42 = dma.done [#allocation6], 512
    $region21: #{tpu_custom_call.1} parent=1 // pred_fallthru
      _
    %v43 = vlaneseq
    %v44 = vand.u32 %v43, 127
    %v45 = vld [vmem:[%s0] sm:$0xff]
    %v46 = vld [vmem:[%s0 + $0x8] sm:$0xff]
    %47 = vset.pattern.permute.xlu0 0
    %48 = vperm.xlu0 %47, %v45
    %v49 = vpop.permute.xlu0 %48
    %50 = vset.pattern.permute.xlu0 0
    %51 = vperm.xlu0 %50, %v46
    %v52 = vpop.permute.xlu0 %51
    %vm53 = vcmp.eq.s32.totalorder %v49, %v44
    %vm54 = vcmp.eq.s32.totalorder %v52, %v44
    %v55 = vsel %vm53, 1, 0
    %v56 = vsel %vm54, 1, 0
    %v57 = vcvt.s32.f32 %v55
    %v58 = vcvt.s32.f32 %v56
    %v59 = vld [vmem:[#allocation2] sm:$0xff]
    %v60 = vld [vmem:[#allocation2 + $0x8] sm:$0xff]
    %v61 = vld [vmem:[#allocation2 + $0x10] sm:$0xff]
    %v62 = vld [vmem:[#allocation2 + $0x18] sm:$0xff]
    %v63 = vld [vmem:[#allocation2 + $0x20] sm:$0xff]
    %v64 = vld [vmem:[#allocation2 + $0x28] sm:$0xff]
    %v65 = vld [vmem:[#allocation2 + $0x30] sm:$0xff]
    %v66 = vld [vmem:[#allocation2 + $0x38] sm:$0xff]
    %vm67 = vcmask 261120
    %v69 = vsel %vm67, %v57, 0
    %v72 = vsel %vm67, %v58, 0
    %74 = vmatprep.subr.mxu0 %v60
    %75 = vmatpush1.msra.mxu0 %v59
    %76 = vmatprep.subr.mxu0 %v62
    %77 = vmatpush1.msra.mxu0 %v61
    %78 = vmatprep.subr.mxu0 %v64
    %79 = vmatpush1.msra.mxu0 %v63
    %80 = vmatprep.subr.mxu0 %v66
    %81 = vmatpush1.msra.mxu0 %v65
    %82 = vmatprep.subr.mxu0 0.0
    %83 = vmatpush1.msra.mxu0 0.0
    %84 = vmatprep.subr.mxu0 0.0
    %85 = vmatpush1.msra.mxu0 0.0
    %86 = vmatprep.subr.mxu0 0.0
    %87 = vmatpush1.msra.mxu0 0.0
    %88 = vmatprep.subr.mxu0 0.0
    %89 = vmatpush1.msra.mxu0 0.0
    %90 = vmatprep.subr.mxu0 0.0
    %91 = vmatpush1.msra.mxu0 0.0
    %92 = vmatprep.subr.mxu0 0.0
    %93 = vmatpush1.msra.mxu0 0.0
    %94 = vmatprep.subr.mxu0 0.0
    %95 = vmatpush1.msra.mxu0 0.0
    %96 = vmatprep.subr.mxu0 0.0
    %97 = vmatpush1.msra.mxu0 0.0
    %98 = vmatprep.subr.mxu0 0.0
    %99 = vmatpush1.msra.mxu0 0.0
    %100 = vmatprep.subr.mxu0 0.0
    %101 = vmatpush1.msra.mxu0 0.0
    %102 = vmatprep.subr.mxu0 0.0
    %103 = vmatpush1.msra.mxu0 0.0
    %104 = vmatprep.subr.mxu0 0.0
    %105 = vmatpush1.msra.mxu0 0.0
    %106 = vmatprep.subr.mxu0 0.0
    %107 = vmatpush1.msra.mxu0 0.0
    %108 = vmatprep.subr.mxu0 0.0
    %109 = vmatpush1.msra.mxu0 0.0
    %110 = vmatprep.subr.mxu0 0.0
    %111 = vmatpush1.msra.mxu0 0.0
    %112 = vmatprep.subr.mxu0 0.0
    %113 = vmatpush1.msra.mxu0 0.0
    %114 = vmatprep.subr.mxu0 0.0
    %115 = vmatpush1.msra.mxu0 0.0
    %116 = vmatprep.subr.mxu0 0.0
    %117 = vmatpush1.msra.mxu0 0.0
    %118 = vmatprep.subr.mxu0 0.0
    %119 = vmatpush1.msra.mxu0 0.0
    %120 = vmatprep.subr.mxu0 0.0
    %121 = vmatpush1.msra.mxu0 0.0
    %122 = vmatprep.subr.mxu0 0.0
    %123 = vmatpush1.msra.mxu0 0.0
    %124 = vmatprep.subr.mxu0 0.0
    %125 = vmatpush1.msra.mxu0 0.0
    %126 = vmatprep.subr.mxu0 0.0
    %127 = vmatpush1.msra.mxu0 0.0
    %128 = vmatprep.subr.mxu0 0.0
    %129 = vmatpush1.msra.mxu0 0.0
    %130 = vmatprep.subr.mxu0 0.0
    %131 = vmatpush1.msra.mxu0 0.0
    %132 = vmatprep.subr.mxu0 0.0
    %133 = vmatpush1.msra.mxu0 0.0
    %134 = vmatprep.subr.mxu0 0.0
    %135 = vmatpush1.msra.mxu0 0.0
    %136 = vmatprep.subr.mxu0 0.0
    %137 = vmatpush1.msra.mxu0 0.0
    %138 = vmatprep.mubr.f32.mxu0 0.0
    %139 = vmatmul.mubr.f32.gmra.mrb[0].mxu0 %v69
    %v140 = vpop.f32.mrb[0].mxu0
    %v141 = vadd.f32 0.0, %v140
    %v142 = vpop.f32.mrb[0].mxu0
    %v143 = vadd.f32 0.0, %v142
    %144 = vmatprep.mubr.f32.mxu0 0.0
    %145 = vmatmul.mubr.f32.gmra.mrb[0].mxu0 %v72
    %v146 = vpop.f32.mrb[0].mxu0
    %v147 = vadd.f32 0.0, %v146
    %v148 = vpop.f32.mrb[0].mxu0
    %v149 = vadd.f32 0.0, %v148
    %150 = vdwg.mxu0
    %v151 = vmul.f32 %v141, 16.0
    %v152 = vmul.f32 %v143, 16.0
    %v153 = vmul.f32 %v147, 16.0
    %v154 = vmul.f32 %v149, 16.0
    %v155 = vld [vmem:[#allocation5] sm:$0xff]
    %v156 = vld [vmem:[#allocation5 + $0x8] sm:$0xff]
    %v157 = vld [vmem:[#allocation5 + $0x10] sm:$0xff]
    %v158 = vld [vmem:[#allocation5 + $0x18] sm:$0xff]
    %v159 = vadd.f32 %v151, %v155
    %v160 = vadd.f32 %v152, %v156
    %v161 = vadd.f32 %v153, %v157
    %v162 = vadd.f32 %v154, %v158
    %163 = vst [vmem:[#allocation7] sm:$0xff] %v159
    %164 = vst [vmem:[#allocation7 + $0x8] sm:$0xff] %v160
    %165 = vst [vmem:[#allocation7 + $0x10] sm:$0xff] %v161
    %166 = vst [vmem:[#allocation7 + $0x18] sm:$0xff] %v162
    // Predicated region
    $region22: #{tpu_custom_call.1} parent=1 // pred_check
      _
    $region23: #{tpu_custom_call.1} parent=1 // pred_check_branch
      %168 = sbr.rel (0) target = $region25
    $region24: #{tpu_custom_call.1} parent=1 // pred_region
      %s170 = ssub.s32 512, 512
      %171 = vsyncadd [#allocation4], %s170
      %s172 = sshll.u32 [#allocation7], 4
      %s173 = int_to_ptr.vmem [resolvable:$true] %s172
      %178 = dma.vmem_to_hbm [thread:$0]  %s173, 512, %s3, [#allocation4], 256, 256, 16
    $region25: #{tpu_custom_call.1} parent=1 // pred_fallthru
      _
    // Predicated region
    $region26: #{tpu_custom_call.1} parent=1 // pred_check
      _
    $region27: #{tpu_custom_call.1} parent=1 // pred_check_branch
      %180 = sbr.rel (0) target = $region29
    $region28: #{tpu_custom_call.1} parent=1 // pred_region
      %181 = dma.done [#allocation4], 512
    $region29: #{tpu_custom_call.1} parent=1 // pred_fallthru
      _
    %182 = vsyncpa [#allocation3], 1
    %183 = vsyncpa [#allocation6], 1
    %184 = vsyncpa [#allocation4], 1

</llo_original>
